<compile_context>
chip_gen: v7x
topology: tpu7x:2x2x1
jax: 0.10.0
libtpu: 0.0.40
codegen_flags: <defaults>
</compile_context>

<pallas_src>
import functools

import jax
import jax.numpy as jnp
from jax.experimental import pallas as pl
from jax.experimental.pallas import tpu as pltpu

LANE = 128
SUBLANE = 8


def _round_up(x, m):
    return (x + m - 1) // m * m


# ----------------------- phase 1: sequential recurrence -----------------------

def _rnn_recurrent_kernel(x_ref, h0_ref, w_rec_ref, b_h_ref,
                          hseq_ref, hT_ref, comb_ref, *,
                          chunk, seq_len, total_steps, input_pad):
    """Recurrence over `chunk` timesteps per grid step (grid axis = chunks).

    x_ref    : [chunk, B_pad, I_pad]      timestep inputs for this chunk
    h0_ref   : [B_pad, H_pad]             initial hidden (resident)
    w_rec_ref: [I_pad + H_pad, H_pad]     stacked [W_in_h ; W_hid_h] (resident)
    b_h_ref  : [1, H_pad]                 hidden bias (resident)
    hseq_ref : [chunk, B_pad, H_pad]      pre-step hidden h_{t-1} for each t
    hT_ref   : [B_pad, H_pad]             final hidden (written on last chunk)
    comb_ref : [B_pad, I_pad + H_pad] f32 resident [x_t | h_{t-1}] carry
    """
    c = pl.program_id(0)

    @pl.when(c == 0)
    def _():
        comb_ref[:, input_pad:] = h0_ref[...].astype(jnp.float32)

    w_rec = w_rec_ref[...]
    b_h = b_h_ref[...]
    masked = total_steps != seq_len  # time axis was padded up to a chunk multiple

    # Statically unrolled inner time loop (chunk is a small static constant).
    for u in range(chunk):
        h_prev = comb_ref[:, input_pad:]
        hseq_ref[u] = h_prev                       # h_{t-1} for phase 2
        comb_ref[:, :input_pad] = x_ref[u].astype(jnp.float32)
        # One fused K = I_pad + H_pad MXU pass (instead of two K=128 dots).
        nh = jnp.dot(comb_ref[...], w_rec,
                     preferred_element_type=jnp.float32) + b_h
        if masked:
            t = c * chunk + u
            nh = jnp.where(t < seq_len, nh, h_prev)   # freeze h on padded steps
        comb_ref[:, input_pad:] = nh

    @pl.when(c == pl.num_programs(0) - 1)
    def _():
        hT_ref[...] = comb_ref[:, input_pad:].astype(hT_ref.dtype)


# ---------------- phase 2: parallel i2o projection + log-softmax ----------------

def _rnn_output_kernel(x_ref, h_ref, w_in_o_ref, w_hid_o_ref, b_o_ref, out_ref):
    """Batched logits + log-softmax for `chunk` timesteps (fully parallel).

    Padded logit lanes are excluded from the reduction because b_o was
    pre-poisoned to -1e30 there (padded weight columns are zero); the padded
    output lanes therefore contain garbage and are sliced off by the wrapper.
    """
    Tc, B, I = x_ref.shape
    H = h_ref.shape[-1]
    x = x_ref[...].reshape(Tc * B, I).astype(jnp.float32)
    h = h_ref[...].reshape(Tc * B, H).astype(jnp.float32)
    z = (jnp.dot(x, w_in_o_ref[...], preferred_element_type=jnp.float32)
         + jnp.dot(h, w_hid_o_ref[...], preferred_element_type=jnp.float32)
         + b_o_ref[...])
    m = jnp.max(z, axis=-1, keepdims=True)
    shifted = z - m
    lse = jnp.log(jnp.sum(jnp.exp(shifted), axis=-1, keepdims=True))
    out_ref[...] = (shifted - lse).reshape(Tc, B, -1).astype(out_ref.dtype)


# ------------------------------ host-side helpers ------------------------------

def prepare_rnn_params(w_i2h, b_i2h, w_i2o, b_i2o):
    """One-time preprocessing: transpose, split, stack and pad the weights.

    w_i2h: [H, I+H], b_i2h: [H], w_i2o: [O, I+H], b_i2o: [O]
    (nn.Linear layout: y = combined @ W.T + b with combined = [input, hidden]).
    """
    H, fan_in = w_i2h.shape
    O = w_i2o.shape[0]
    I = fan_in - H
    I_pad = _round_up(max(I, LANE), LANE)
    H_pad = _round_up(max(H, LANE), LANE)
    O_pad = _round_up(max(O, LANE), LANE)

    w_h = w_i2h.T.astype(jnp.float32)          # [I+H, H]
    w_o = w_i2o.T.astype(jnp.float32)          # [I+H, O]

    w_in_h = jnp.zeros((I_pad, H_pad), jnp.float32).at[:I, :H].set(w_h[:I])
    w_hid_h = jnp.zeros((H_pad, H_pad), jnp.float32).at[:H, :H].set(w_h[I:])
    # Stacked recurrent weight for the single fused K = I_pad + H_pad dot.
    w_rec = jnp.concatenate([w_in_h, w_hid_h], axis=0)          # [I_pad+H_pad, H_pad]
    b_h = jnp.zeros((1, H_pad), jnp.float32).at[0, :H].set(b_i2h)

    w_in_o = jnp.zeros((I_pad, O_pad), jnp.float32).at[:I, :O].set(w_o[:I])
    w_hid_o = jnp.zeros((H_pad, O_pad), jnp.float32).at[:H, :O].set(w_o[I:])
    # Bake the padded-lane mask into the bias: padded logit lanes -> -1e30 so
    # the in-kernel log-softmax reduction ignores them with no extra VPU work.
    b_o = jnp.full((1, O_pad), -1e30, jnp.float32).at[0, :O].set(b_i2o)

    # Note: weights / x / carried hidden could additionally be stored as
    # bfloat16 for single-pass MXU issue (biggest win on v5e); kept f32 here to
    # preserve the module's f32 numerics and tight test tolerances.
    return dict(
        w_rec=w_rec, b_h=b_h, w_in_o=w_in_o, w_hid_o=w_hid_o, b_o=b_o,
        input_size=I, hidden_size=H, output_size=O,
        input_pad=I_pad, hidden_pad=H_pad, output_pad=O_pad,
    )


def rnn_sequence(xs, h0, params, *, chunk=8):
    """Run the RNN over a whole sequence.

    xs: [T, B, input_size], h0: [B, hidden_size]
    returns (per-step log-softmax outputs [T, B, output_size],
             final hidden [B, hidden_size])
    """
    T, B, I = xs.shape
    H = params["hidden_size"]
    O = params["output_size"]
    I_pad = params["input_pad"]
    H_pad = params["hidden_pad"]
    O_pad = params["output_pad"]

    chunk = max(1, min(chunk, T))
    T_pad = _round_up(T, chunk)
    B_pad = _round_up(max(B, SUBLANE), SUBLANE)
    num_chunks = T_pad // chunk

    xs_p = jnp.pad(xs, ((0, T_pad - T), (0, B_pad - B), (0, I_pad - I)))
    h0_p = jnp.pad(h0, ((0, B_pad - B), (0, H_pad - H)))

    # ---- Phase 1: sequential recurrence (weights & hidden VMEM-resident) ----
    p1_kernel = functools.partial(
        _rnn_recurrent_kernel, chunk=chunk, seq_len=T, total_steps=T_pad,
        input_pad=I_pad)

    hseq_p, hT_p = pl.pallas_call(
        p1_kernel,
        out_shape=(
            jax.ShapeDtypeStruct((T_pad, B_pad, H_pad), jnp.float32),
            jax.ShapeDtypeStruct((B_pad, H_pad), xs.dtype),
        ),
        grid_spec=pltpu.PrefetchScalarGridSpec(
            num_scalar_prefetch=0,
            grid=(num_chunks,),
            in_specs=[
                # Chunk of timestep inputs.
                pl.BlockSpec((chunk, B_pad, I_pad), lambda c: (c, 0, 0)),
                # h0 / weights / bias: constant block index -> DMA'd once.
                pl.BlockSpec((B_pad, H_pad), lambda c: (0, 0)),
                pl.BlockSpec((I_pad + H_pad, H_pad), lambda c: (0, 0)),
                pl.BlockSpec((1, H_pad), lambda c: (0, 0)),
            ],
            out_specs=(
                pl.BlockSpec((chunk, B_pad, H_pad), lambda c: (c, 0, 0)),
                pl.BlockSpec((B_pad, H_pad), lambda c: (0, 0)),
            ),
            scratch_shapes=[pltpu.VMEM((B_pad, I_pad + H_pad), jnp.float32)],
        ),
        compiler_params=pltpu.CompilerParams(
            # Time chunks are sequentially dependent.
            dimension_semantics=("arbitrary",),
        ),
    )(xs_p, h0_p, params["w_rec"], params["b_h"])

    # ---- Phase 2: parallel logits + log-softmax over all timesteps ----
    outs_p = pl.pallas_call(
        _rnn_output_kernel,
        out_shape=jax.ShapeDtypeStruct((T_pad, B_pad, O_pad), xs.dtype),
        grid_spec=pltpu.PrefetchScalarGridSpec(
            num_scalar_prefetch=0,
            grid=(num_chunks,),
            in_specs=[
                pl.BlockSpec((chunk, B_pad, I_pad), lambda c: (c, 0, 0)),
                pl.BlockSpec((chunk, B_pad, H_pad), lambda c: (c, 0, 0)),
                pl.BlockSpec((I_pad, O_pad), lambda c: (0, 0)),
                pl.BlockSpec((H_pad, O_pad), lambda c: (0, 0)),
                pl.BlockSpec((1, O_pad), lambda c: (0, 0)),
            ],
            out_specs=pl.BlockSpec((chunk, B_pad, O_pad), lambda c: (c, 0, 0)),
        ),
        compiler_params=pltpu.CompilerParams(
            # Fully parallel; shards across TensorCores on v7x.
            dimension_semantics=("parallel",),
        ),
    )(xs_p, hseq_p, params["w_in_o"], params["w_hid_o"], params["b_o"])

    return outs_p[:T, :B, :O], hT_p[:B, :H]


def make_rnn_forward(w_i2h, b_i2h, w_i2o, b_i2o):
    """Single-step forward matching RNN.forward(input, hidden); the weight
    fusion / transpose / padding is done ONCE here, not per call."""
    params = prepare_rnn_params(w_i2h, b_i2h, w_i2o, b_i2o)

    def forward(inp, hidden):
        out, next_hidden = rnn_sequence(inp[None], hidden, params, chunk=1)
        return out[0], next_hidden

    return forward


# ----------------------------- pure-JAX reference -----------------------------

def _reference_step(x, h, w_i2h, b_i2h, w_i2o, b_i2o):
    combined = jnp.concatenate([x, h], axis=1)
    nh = combined @ w_i2h.T + b_i2h
    logits = combined @ w_i2o.T + b_i2o
    return jax.nn.log_softmax(logits, axis=1), nh


def _reference_sequence(xs, h0, w_i2h, b_i2h, w_i2o, b_i2o):
    def step(h, x):
        out, nh = _reference_step(x, h, w_i2h, b_i2h, w_i2o, b_i2o)
        return nh, out
    hT, outs = jax.lax.scan(step, h0, xs)
    return outs, hT


if __name__ == "__main__":
    batch = 2
    seq_len = 10
    input_size = 57      # n_letters in the original tutorial
    hidden_size = 128    # num_hidden
    output_size = 18     # n_categories in the original tutorial

    key = jax.random.PRNGKey(0)
    k1, k2, k3, k4, k5 = jax.random.split(key, 5)

    fan_in = input_size + hidden_size
    bound = 1.0 / jnp.sqrt(fan_in)
    w_i2h = jax.random.uniform(k1, (hidden_size, fan_in), jnp.float32, -bound, bound)
    b_i2h = jax.random.uniform(k2, (hidden_size,), jnp.float32, -bound, bound)
    w_i2o = jax.random.uniform(k3, (output_size, fan_in), jnp.float32, -bound, bound)
    b_i2o = jax.random.uniform(k4, (output_size,), jnp.float32, -bound, bound)

    xs = jax.random.normal(k5, (seq_len, batch, input_size), jnp.float32)
    h0 = jnp.zeros((batch, hidden_size), jnp.float32)   # init_hidden()

    # One-time parameter preprocessing (fusion, transpose, padding).
    params = prepare_rnn_params(w_i2h, b_i2h, w_i2o, b_i2o)

    # Whole sequence; chunk=4 exercises multi-chunk carry and ragged-T masking.
    outs, hT = rnn_sequence(xs, h0, params, chunk=4)
    outs = jax.block_until_ready(outs)
    hT = jax.block_until_ready(hT)

    ref_outs, ref_hT = _reference_sequence(xs, h0, w_i2h, b_i2h, w_i2o, b_i2o)
    assert jnp.allclose(outs, ref_outs, atol=1e-4), "sequence log_softmax mismatch"
    assert jnp.allclose(hT, ref_hT, atol=1e-4), "final hidden mismatch"

    # Single-step path matching the original RNN.forward signature
    # (prepared params cached in the closure, not rebuilt per call).
    rnn_forward = make_rnn_forward(w_i2h, b_i2h, w_i2o, b_i2o)
    out1, h1 = rnn_forward(xs[0], h0)
    out1 = jax.block_until_ready(out1)
    h1 = jax.block_until_ready(h1)
    ref_out1, ref_h1 = _reference_step(xs[0], h0, w_i2h, b_i2h, w_i2o, b_i2o)
    assert jnp.allclose(out1, ref_out1, atol=1e-4), "single-step output mismatch"
    assert jnp.allclose(h1, ref_h1, atol=1e-4), "single-step hidden mismatch"

    print("KERNEL_OK")
</pallas_src>

<mosaic_0001>
module attributes {stable_mosaic.version = 11 : i64} {
  func.func @_rnn_recurrent_kernel(%arg0: i32, %arg1: memref<4x8x128xf32, #tpu.memory_space<vmem>>, %arg2: memref<8x128xf32, #tpu.memory_space<vmem>>, %arg3: memref<256x128xf32, #tpu.memory_space<vmem>>, %arg4: memref<1x128xf32, #tpu.memory_space<vmem>>, %arg5: memref<4x8x128xf32, #tpu.memory_space<vmem>>, %arg6: memref<8x128xf32, #tpu.memory_space<vmem>>, %arg7: memref<8x256xf32, #tpu.memory_space<vmem>>) attributes {dimension_semantics = [#tpu.dimension_semantics<arbitrary>], iteration_bounds = array<i64: 3>, scalar_prefetch = 0 : i64, scratch_operands = 1 : i64, tpu.core_type = #tpu.core_type<tc>, window_params = [{transform_indices = @transform_0, window_bounds = array<i64: 4, 8, 128>}, {pipeline_mode = #tpu.pipeline_mode<synchronous>, transform_indices = @transform_1, window_bounds = array<i64: 8, 128>}, {pipeline_mode = #tpu.pipeline_mode<synchronous>, transform_indices = @transform_2, window_bounds = array<i64: 256, 128>}, {pipeline_mode = #tpu.pipeline_mode<synchronous>, transform_indices = @transform_3, window_bounds = array<i64: 1, 128>}, {transform_indices = @transform_4, window_bounds = array<i64: 4, 8, 128>}, {pipeline_mode = #tpu.pipeline_mode<synchronous>, transform_indices = @transform_5, window_bounds = array<i64: 8, 128>}]} {
    %c0_i32 = arith.constant 0 : i32
    %0 = arith.cmpi eq, %arg0, %c0_i32 : i32
    %1 = arith.extui %0 : i1 to i32
    %c0_i32_0 = arith.constant 0 : i32
    %2 = arith.cmpi ne, %1, %c0_i32_0 : i32
    scf.if %2 {
      %c0_68 = arith.constant 0 : index
      %c0_69 = arith.constant 0 : index
      %72 = vector.load %arg2[%c0_68, %c0_69] : memref<8x128xf32, #tpu.memory_space<vmem>>, vector<8x128xf32>
      %c0_70 = arith.constant 0 : index
      %c128_71 = arith.constant 128 : index
      %73 = vector.load %arg7[%c0_70, %c128_71] : memref<8x256xf32, #tpu.memory_space<vmem>>, vector<8x128xf32>
      tpu.vector_store %arg7[%c0_70, %c128_71], %72 {strides = array<i32>} : memref<8x256xf32, #tpu.memory_space<vmem>>, vector<8x128xf32>,
    } else {
    }
    %c0 = arith.constant 0 : index
    %c0_1 = arith.constant 0 : index
    %3 = vector.load %arg3[%c0, %c0_1] : memref<256x128xf32, #tpu.memory_space<vmem>>, vector<256x128xf32>
    %c0_2 = arith.constant 0 : index
    %c0_3 = arith.constant 0 : index
    %4 = vector.load %arg4[%c0_2, %c0_3] : memref<1x128xf32, #tpu.memory_space<vmem>>, vector<1x128xf32>
    %c0_4 = arith.constant 0 : index
    %c128 = arith.constant 128 : index
    %5 = vector.load %arg7[%c0_4, %c128] : memref<8x256xf32, #tpu.memory_space<vmem>>, vector<8x128xf32>
    %c0_5 = arith.constant 0 : index
    %c0_6 = arith.constant 0 : index
    %c0_7 = arith.constant 0 : index
    %6 = vector.load %arg5[%c0_5, %c0_6, %c0_7] : memref<4x8x128xf32, #tpu.memory_space<vmem>>, vector<1x8x128xf32>
    %7 = vector.shape_cast %6 : vector<1x8x128xf32> to vector<8x128xf32>
    %8 = vector.shape_cast %5 : vector<8x128xf32> to vector<1x8x128xf32>
    tpu.vector_store %arg5[%c0_5, %c0_6, %c0_7], %8 {strides = array<i32>} : memref<4x8x128xf32, #tpu.memory_space<vmem>>, vector<1x8x128xf32>,
    %c0_8 = arith.constant 0 : index
    %c0_9 = arith.constant 0 : index
    %c0_10 = arith.constant 0 : index
    %9 = vector.load %arg1[%c0_8, %c0_9, %c0_10] : memref<4x8x128xf32, #tpu.memory_space<vmem>>, vector<1x8x128xf32>
    %10 = vector.shape_cast %9 : vector<1x8x128xf32> to vector<8x128xf32>
    %c0_11 = arith.constant 0 : index
    %c0_12 = arith.constant 0 : index
    %11 = vector.load %arg7[%c0_11, %c0_12] : memref<8x256xf32, #tpu.memory_space<vmem>>, vector<8x128xf32>
    tpu.vector_store %arg7[%c0_11, %c0_12], %10 {strides = array<i32>} : memref<8x256xf32, #tpu.memory_space<vmem>>, vector<8x128xf32>,
    %c0_13 = arith.constant 0 : index
    %c0_14 = arith.constant 0 : index
    %12 = vector.load %arg7[%c0_13, %c0_14] : memref<8x256xf32, #tpu.memory_space<vmem>>, vector<8x256xf32>
    %cst = arith.constant dense<0.000000e+00> : vector<8x128xf32>
    %13 = tpu.matmul %12, %3, %cst {dimension_numbers = #tpu.dot_dimension_numbers<[1], [0], [0], [1], [0, 0, 1, 1], [], []>} : vector<8x256xf32>, vector<256x128xf32>, vector<8x128xf32> -> vector<8x128xf32>
    %14 = vector.broadcast %4 : vector<1x128xf32> to vector<8x128xf32>
    %15 = arith.addf %13, %14 : vector<8x128xf32>
    %c4_i32 = arith.constant 4 : i32
    %16 = arith.muli %arg0, %c4_i32 : i32
    %c0_i32_15 = arith.constant 0 : i32
    %17 = arith.addi %16, %c0_i32_15 : i32
    %c10_i32 = arith.constant 10 : i32
    %18 = arith.cmpi slt, %17, %c10_i32 : i32
    %19 = arith.select %18, %15, %5 : vector<8x128xf32>
    %c0_16 = arith.constant 0 : index
    %c128_17 = arith.constant 128 : index
    %20 = vector.load %arg7[%c0_16, %c128_17] : memref<8x256xf32, #tpu.memory_space<vmem>>, vector<8x128xf32>
    tpu.vector_store %arg7[%c0_16, %c128_17], %19 {strides = array<i32>} : memref<8x256xf32, #tpu.memory_space<vmem>>, vector<8x128xf32>,
    %c0_18 = arith.constant 0 : index
    %c128_19 = arith.constant 128 : index
    %21 = vector.load %arg7[%c0_18, %c128_19] : memref<8x256xf32, #tpu.memory_space<vmem>>, vector<8x128xf32>
    %c1 = arith.constant 1 : index
    %c0_20 = arith.constant 0 : index
    %c0_21 = arith.constant 0 : index
    %22 = vector.load %arg5[%c1, %c0_20, %c0_21] : memref<4x8x128xf32, #tpu.memory_space<vmem>>, vector<1x8x128xf32>
    %23 = vector.shape_cast %22 : vector<1x8x128xf32> to vector<8x128xf32>
    %24 = vector.shape_cast %21 : vector<8x128xf32> to vector<1x8x128xf32>
    tpu.vector_store %arg5[%c1, %c0_20, %c0_21], %24 {strides = array<i32>} : memref<4x8x128xf32, #tpu.memory_space<vmem>>, vector<1x8x128xf32>,
    %c1_22 = arith.constant 1 : index
    %c0_23 = arith.constant 0 : index
    %c0_24 = arith.constant 0 : index
    %25 = vector.load %arg1[%c1_22, %c0_23, %c0_24] : memref<4x8x128xf32, #tpu.memory_space<vmem>>, vector<1x8x128xf32>
    %26 = vector.shape_cast %25 : vector<1x8x128xf32> to vector<8x128xf32>
    %c0_25 = arith.constant 0 : index
    %c0_26 = arith.constant 0 : index
    %27 = vector.load %arg7[%c0_25, %c0_26] : memref<8x256xf32, #tpu.memory_space<vmem>>, vector<8x128xf32>
    tpu.vector_store %arg7[%c0_25, %c0_26], %26 {strides = array<i32>} : memref<8x256xf32, #tpu.memory_space<vmem>>, vector<8x128xf32>,
    %c0_27 = arith.constant 0 : index
    %c0_28 = arith.constant 0 : index
    %28 = vector.load %arg7[%c0_27, %c0_28] : memref<8x256xf32, #tpu.memory_space<vmem>>, vector<8x256xf32>
    %cst_29 = arith.constant dense<0.000000e+00> : vector<8x128xf32>
    %29 = tpu.matmul %28, %3, %cst_29 {dimension_numbers = #tpu.dot_dimension_numbers<[1], [0], [0], [1], [0, 0, 1, 1], [], []>} : vector<8x256xf32>, vector<256x128xf32>, vector<8x128xf32> -> vector<8x128xf32>
    %30 = vector.broadcast %4 : vector<1x128xf32> to vector<8x128xf32>
    %31 = arith.addf %29, %30 : vector<8x128xf32>
    %c4_i32_30 = arith.constant 4 : i32
    %32 = arith.muli %arg0, %c4_i32_30 : i32
    %c1_i32 = arith.constant 1 : i32
    %33 = arith.addi %32, %c1_i32 : i32
    %c10_i32_31 = arith.constant 10 : i32
    %34 = arith.cmpi slt, %33, %c10_i32_31 : i32
    %35 = arith.select %34, %31, %21 : vector<8x128xf32>
    %c0_32 = arith.constant 0 : index
    %c128_33 = arith.constant 128 : index
    %36 = vector.load %arg7[%c0_32, %c128_33] : memref<8x256xf32, #tpu.memory_space<vmem>>, vector<8x128xf32>
    tpu.vector_store %arg7[%c0_32, %c128_33], %35 {strides = array<i32>} : memref<8x256xf32, #tpu.memory_space<vmem>>, vector<8x128xf32>,
    %c0_34 = arith.constant 0 : index
    %c128_35 = arith.constant 128 : index
    %37 = vector.load %arg7[%c0_34, %c128_35] : memref<8x256xf32, #tpu.memory_space<vmem>>, vector<8x128xf32>
    %c2 = arith.constant 2 : index
    %c0_36 = arith.constant 0 : index
    %c0_37 = arith.constant 0 : index
    %38 = vector.load %arg5[%c2, %c0_36, %c0_37] : memref<4x8x128xf32, #tpu.memory_space<vmem>>, vector<1x8x128xf32>
    %39 = vector.shape_cast %38 : vector<1x8x128xf32> to vector<8x128xf32>
    %40 = vector.shape_cast %37 : vector<8x128xf32> to vector<1x8x128xf32>
    tpu.vector_store %arg5[%c2, %c0_36, %c0_37], %40 {strides = array<i32>} : memref<4x8x128xf32, #tpu.memory_space<vmem>>, vector<1x8x128xf32>,
    %c2_38 = arith.constant 2 : index
    %c0_39 = arith.constant 0 : index
    %c0_40 = arith.constant 0 : index
    %41 = vector.load %arg1[%c2_38, %c0_39, %c0_40] : memref<4x8x128xf32, #tpu.memory_space<vmem>>, vector<1x8x128xf32>
    %42 = vector.shape_cast %41 : vector<1x8x128xf32> to vector<8x128xf32>
    %c0_41 = arith.constant 0 : index
    %c0_42 = arith.constant 0 : index
    %43 = vector.load %arg7[%c0_41, %c0_42] : memref<8x256xf32, #tpu.memory_space<vmem>>, vector<8x128xf32>
    tpu.vector_store %arg7[%c0_41, %c0_42], %42 {strides = array<i32>} : memref<8x256xf32, #tpu.memory_space<vmem>>, vector<8x128xf32>,
    %c0_43 = arith.constant 0 : index
    %c0_44 = arith.constant 0 : index
    %44 = vector.load %arg7[%c0_43, %c0_44] : memref<8x256xf32, #tpu.memory_space<vmem>>, vector<8x256xf32>
    %cst_45 = arith.constant dense<0.000000e+00> : vector<8x128xf32>
    %45 = tpu.matmul %44, %3, %cst_45 {dimension_numbers = #tpu.dot_dimension_numbers<[1], [0], [0], [1], [0, 0, 1, 1], [], []>} : vector<8x256xf32>, vector<256x128xf32>, vector<8x128xf32> -> vector<8x128xf32>
    %46 = vector.broadcast %4 : vector<1x128xf32> to vector<8x128xf32>
    %47 = arith.addf %45, %46 : vector<8x128xf32>
    %c4_i32_46 = arith.constant 4 : i32
    %48 = arith.muli %arg0, %c4_i32_46 : i32
    %c2_i32 = arith.constant 2 : i32
    %49 = arith.addi %48, %c2_i32 : i32
    %c10_i32_47 = arith.constant 10 : i32
    %50 = arith.cmpi slt, %49, %c10_i32_47 : i32
    %51 = arith.select %50, %47, %37 : vector<8x128xf32>
    %c0_48 = arith.constant 0 : index
    %c128_49 = arith.constant 128 : index
    %52 = vector.load %arg7[%c0_48, %c128_49] : memref<8x256xf32, #tpu.memory_space<vmem>>, vector<8x128xf32>
    tpu.vector_store %arg7[%c0_48, %c128_49], %51 {strides = array<i32>} : memref<8x256xf32, #tpu.memory_space<vmem>>, vector<8x128xf32>,
    %c0_50 = arith.constant 0 : index
    %c128_51 = arith.constant 128 : index
    %53 = vector.load %arg7[%c0_50, %c128_51] : memref<8x256xf32, #tpu.memory_space<vmem>>, vector<8x128xf32>
    %c3 = arith.constant 3 : index
    %c0_52 = arith.constant 0 : index
    %c0_53 = arith.constant 0 : index
    %54 = vector.load %arg5[%c3, %c0_52, %c0_53] : memref<4x8x128xf32, #tpu.memory_space<vmem>>, vector<1x8x128xf32>
    %55 = vector.shape_cast %54 : vector<1x8x128xf32> to vector<8x128xf32>
    %56 = vector.shape_cast %53 : vector<8x128xf32> to vector<1x8x128xf32>
    tpu.vector_store %arg5[%c3, %c0_52, %c0_53], %56 {strides = array<i32>} : memref<4x8x128xf32, #tpu.memory_space<vmem>>, vector<1x8x128xf32>,
    %c3_54 = arith.constant 3 : index
    %c0_55 = arith.constant 0 : index
    %c0_56 = arith.constant 0 : index
    %57 = vector.load %arg1[%c3_54, %c0_55, %c0_56] : memref<4x8x128xf32, #tpu.memory_space<vmem>>, vector<1x8x128xf32>
    %58 = vector.shape_cast %57 : vector<1x8x128xf32> to vector<8x128xf32>
    %c0_57 = arith.constant 0 : index
    %c0_58 = arith.constant 0 : index
    %59 = vector.load %arg7[%c0_57, %c0_58] : memref<8x256xf32, #tpu.memory_space<vmem>>, vector<8x128xf32>
    tpu.vector_store %arg7[%c0_57, %c0_58], %58 {strides = array<i32>} : memref<8x256xf32, #tpu.memory_space<vmem>>, vector<8x128xf32>,
    %c0_59 = arith.constant 0 : index
    %c0_60 = arith.constant 0 : index
    %60 = vector.load %arg7[%c0_59, %c0_60] : memref<8x256xf32, #tpu.memory_space<vmem>>, vector<8x256xf32>
    %cst_61 = arith.constant dense<0.000000e+00> : vector<8x128xf32>
    %61 = tpu.matmul %60, %3, %cst_61 {dimension_numbers = #tpu.dot_dimension_numbers<[1], [0], [0], [1], [0, 0, 1, 1], [], []>} : vector<8x256xf32>, vector<256x128xf32>, vector<8x128xf32> -> vector<8x128xf32>
    %62 = vector.broadcast %4 : vector<1x128xf32> to vector<8x128xf32>
    %63 = arith.addf %61, %62 : vector<8x128xf32>
    %c4_i32_62 = arith.constant 4 : i32
    %64 = arith.muli %arg0, %c4_i32_62 : i32
    %c3_i32 = arith.constant 3 : i32
    %65 = arith.addi %64, %c3_i32 : i32
    %c10_i32_63 = arith.constant 10 : i32
    %66 = arith.cmpi slt, %65, %c10_i32_63 : i32
    %67 = arith.select %66, %63, %53 : vector<8x128xf32>
    %c0_64 = arith.constant 0 : index
    %c128_65 = arith.constant 128 : index
    %68 = vector.load %arg7[%c0_64, %c128_65] : memref<8x256xf32, #tpu.memory_space<vmem>>, vector<8x128xf32>
    tpu.vector_store %arg7[%c0_64, %c128_65], %67 {strides = array<i32>} : memref<8x256xf32, #tpu.memory_space<vmem>>, vector<8x128xf32>,
    %c2_i32_66 = arith.constant 2 : i32
    %69 = arith.cmpi eq, %arg0, %c2_i32_66 : i32
    %70 = arith.extui %69 : i1 to i32
    %c0_i32_67 = arith.constant 0 : i32
    %71 = arith.cmpi ne, %70, %c0_i32_67 : i32
    scf.if %71 {
      %c0_68 = arith.constant 0 : index
      %c128_69 = arith.constant 128 : index
      %72 = vector.load %arg7[%c0_68, %c128_69] : memref<8x256xf32, #tpu.memory_space<vmem>>, vector<8x128xf32>
      %c0_70 = arith.constant 0 : index
      %c0_71 = arith.constant 0 : index
      %73 = vector.load %arg6[%c0_70, %c0_71] : memref<8x128xf32, #tpu.memory_space<vmem>>, vector<8x128xf32>
      tpu.vector_store %arg6[%c0_70, %c0_71], %72 {strides = array<i32>} : memref<8x128xf32, #tpu.memory_space<vmem>>, vector<8x128xf32>,
    } else {
    }
    return
  }
  func.func @transform_0(%arg0: i32) -> (i32, i32, i32) {
    %c0_i32 = arith.constant 0 : i32
    %c0_i32_0 = arith.constant 0 : i32
    %c0_i32_1 = arith.constant 0 : i32
    return %arg0, %c0_i32, %c0_i32_0 : i32, i32, i32
  }
  func.func @transform_1(%arg0: i32) -> (i32, i32) {
    %c0_i32 = arith.constant 0 : i32
    %c0_i32_0 = arith.constant 0 : i32
    %c0_i32_1 = arith.constant 0 : i32
    return %c0_i32, %c0_i32_0 : i32, i32
  }
  func.func @transform_2(%arg0: i32) -> (i32, i32) {
    %c0_i32 = arith.constant 0 : i32
    %c0_i32_0 = arith.constant 0 : i32
    %c0_i32_1 = arith.constant 0 : i32
    return %c0_i32, %c0_i32_0 : i32, i32
  }
  func.func @transform_3(%arg0: i32) -> (i32, i32) {
    %c0_i32 = arith.constant 0 : i32
    %c0_i32_0 = arith.constant 0 : i32
    %c0_i32_1 = arith.constant 0 : i32
    return %c0_i32, %c0_i32_0 : i32, i32
  }
  func.func @transform_4(%arg0: i32) -> (i32, i32, i32) {
    %c0_i32 = arith.constant 0 : i32
    %c0_i32_0 = arith.constant 0 : i32
    %c0_i32_1 = arith.constant 0 : i32
    return %arg0, %c0_i32, %c0_i32_0 : i32, i32, i32
  }
  func.func @transform_5(%arg0: i32) -> (i32, i32) {
    %c0_i32 = arith.constant 0 : i32
    %c0_i32_0 = arith.constant 0 : i32
    %c0_i32_1 = arith.constant 0 : i32
    return %c0_i32, %c0_i32_0 : i32, i32
  }
}

</mosaic_0001>

<llo_original>
// kernel: tpu_custom_call.1
$region0: #{tpu_custom_call.1}
  #allocation0 [shape = 'u32[]', space=smem, size = 0x4, offset = 0x4, fixed_abs, tag = 'smem constant byte address 0x4 - core index']
  #allocation1 [shape = 'u32[144,128]{1,0:T(1,128)}', space=vmem, size = 0x12000, scoped, tag = 'internal scratch']
  #allocation2 [shape = 'f32[8,256]{1,0:T(8,128)}', space=vmem, size = 0x2000, scoped, tag = 'scratch operand']
  %s0 = inlined_call_operand.hbm [shape: f32[12,8,128], index: 0, kind: input, shape index: {}]
  %s1 = inlined_call_operand.hbm [shape: f32[8,128], index: 1, kind: input, shape index: {}]
  %s2 = inlined_call_operand.hbm [shape: f32[256,128], index: 2, kind: input, shape index: {}]
  %s3 = inlined_call_operand.vmem [shape: f32[1,128], index: 3, kind: input, shape index: {}]
  %s4 = inlined_call_operand.hbm [shape: f32[12,8,128], index: 4, kind: output, shape index: {0}]
  %s5 = inlined_call_operand.hbm [shape: f32[8,128], index: 5, kind: output, shape index: {1}]
  %6 = xla_tuple %s4, %s5
  %s7 = sld [smem:[#allocation0]]
  $region77: #{tpu_custom_call.1} parent=0
    _
  %s9 = ssub.s32 1, %s7
  %s10 = scalar_select 0, %s9, %s7
  $region1: #{tpu_custom_call.1} parent=0
    #allocation3 [shape = 'u8[32768]{0}', space=vmem, size = 0x8000, scoped, tag = 'input window, operand 0']
    #allocation4 [shape = 's32[2]{0}', space=sflag, size = 0x8, scoped, tag = 'scoped memory for tpu_custom_call.1']
    #allocation5 [shape = 's32[2]{0}', space=sflag, size = 0x8, scoped, tag = 'scoped memory for tpu_custom_call.1']
    #allocation6 [shape = 'u8[4096]{0}', space=vmem, size = 0x1000, scoped, tag = 'input window, operand 1, single buffered']
    #allocation7 [shape = 's32[1]{0}', space=sflag, size = 0x4, scoped, tag = 'scoped memory for tpu_custom_call.1']
    #allocation8 [shape = 'u8[131072]{0}', space=vmem, size = 0x20000, scoped, tag = 'input window, operand 2, single buffered']
    #allocation9 [shape = 'u8[32768]{0}', space=vmem, size = 0x8000, scoped, tag = 'output window, operand 0']
    #allocation10 [shape = 'u8[4096]{0}', space=vmem, size = 0x1000, scoped, tag = 'output window, operand 1, single buffered']
    #allocation11 [shape = 's32[1]{0}', space=sflag, size = 0x4, scoped, tag = 'scoped memory for tpu_custom_call.1']
    %11 = vsyncpa [#allocation4], 0
    %s12 = scalar_lea.sflag [#allocation4], 1
    %13 = vsyncpa %s12, 0
    %14 = vsyncpa [#allocation7], 0
    %15 = vsyncpa [#allocation5], 0
    %s16 = scalar_lea.sflag [#allocation5], 1
    %17 = vsyncpa %s16, 0
    %18 = vsyncpa [#allocation11], 0
    loop: start=0, step=1, limit=5
    $region2: #{tpu_custom_call.1} parent=1 // loop_pre_header
      _
    $region3: #{tpu_custom_call.1} parent=1 // loop_header
      %s20 = sphi 0, %s24
      %p21 = scmp.ge.s32.totalorder %s20, 5
      %s30 = sphi 0, %s32
      %s33 = sphi 0, %s30
      %s34 = sphi 0, %s33
      %s50 = sphi 0, %s34
      %s54 = sphi 0, %s54
      %s56 = sphi 0, %s54
      %s57 = sphi 0, %s56
      %s71 = sphi 0, %s57
      %s75 = sphi 0, %s75
      %s77 = sphi 0, %s75
      %s78 = sphi 0, %s77
      %s92 = sphi 0, %s78
      %s96 = sphi 0, %s96
      %s98 = sphi 0, %s96
      %s99 = sphi 0, %s98
      %s113 = sphi 0, %s99
      %s119 = sphi 0, %s121
      %s122 = sphi 0, %s119
      %s123 = sphi 0, %s122
      %s139 = sphi 0, %s123
      %s143 = sphi 0, %s143
      %s145 = sphi 0, %s143
      %s146 = sphi 0, %s145
      %s160 = sphi 0, %s146
    $region4: #{tpu_custom_call.1} parent=1 // loop_header_branch
      %23 = sbr.rel (%p21) target = $region8
    $region5: #{tpu_custom_call.1} parent=1 // loop_body
      %s25 = ssub.s32 %s20, 1
      %s26 = ssub.s32 %s20, 2
      %s27 = sadd.s32 %s20, 1
      %s28 = ssub.s32 %s20, %s27
      %p29 = scmp.eq.s32.totalorder %s28, 0
      %s31 = sadd.s32 %s30, 1
      %s32 = scalar_select %p29, %s30, %s31
      %p35 = pneg %p29
      %p36 = scmp.eq.s32.totalorder %s20, 2
      %p37 = por %p35, %p36
      %p38 = scmp.ne.s32.totalorder %s30, %s33
      %p39 = scmp.eq.s32.totalorder %s20, 0
      %p40 = por %p38, %p39
      %p41 = scmp.ne.s32.totalorder %s30, %s33
      %p42 = scmp.eq.s32.totalorder %s25, 2
      %p43 = por %p41, %p42
      %p44 = scmp.ne.s32.totalorder %s33, %s34
      %p45 = scmp.eq.s32.totalorder %s25, 0
      %p46 = por %p44, %p45
      %p47 = scmp.ne.s32.totalorder %s33, %s34
      %p48 = scmp.eq.s32.totalorder %s26, 2
      %p49 = por %p47, %p48
      %p51 = scmp.ne.s32.totalorder %s34, %s50
      %p52 = scmp.eq.s32.totalorder %s26, 0
      %p53 = por %p51, %p52
      %s55 = sadd.s32 %s54, 1
      %p58 = scmp.eq.s32.totalorder %s20, 2
      %p59 = scmp.ne.s32.totalorder %s54, %s56
      %p60 = scmp.eq.s32.totalorder %s20, 0
      %p61 = por %p59, %p60
      %p62 = scmp.ne.s32.totalorder %s54, %s56
      %p63 = scmp.eq.s32.totalorder %s25, 2
      %p64 = por %p62, %p63
      %p65 = scmp.ne.s32.totalorder %s56, %s57
      %p66 = scmp.eq.s32.totalorder %s25, 0
      %p67 = por %p65, %p66
      %p68 = scmp.ne.s32.totalorder %s56, %s57
      %p69 = scmp.eq.s32.totalorder %s26, 2
      %p70 = por %p68, %p69
      %p72 = scmp.ne.s32.totalorder %s57, %s71
      %p73 = scmp.eq.s32.totalorder %s26, 0
      %p74 = por %p72, %p73
      %s76 = sadd.s32 %s75, 1
      %p79 = scmp.eq.s32.totalorder %s20, 2
      %p80 = scmp.ne.s32.totalorder %s75, %s77
      %p81 = scmp.eq.s32.totalorder %s20, 0
      %p82 = por %p80, %p81
      %p83 = scmp.ne.s32.totalorder %s75, %s77
      %p84 = scmp.eq.s32.totalorder %s25, 2
      %p85 = por %p83, %p84
      %p86 = scmp.ne.s32.totalorder %s77, %s78
      %p87 = scmp.eq.s32.totalorder %s25, 0
      %p88 = por %p86, %p87
      %p89 = scmp.ne.s32.totalorder %s77, %s78
      %p90 = scmp.eq.s32.totalorder %s26, 2
      %p91 = por %p89, %p90
      %p93 = scmp.ne.s32.totalorder %s78, %s92
      %p94 = scmp.eq.s32.totalorder %s26, 0
      %p95 = por %p93, %p94
      %s97 = sadd.s32 %s96, 1
      %p100 = scmp.eq.s32.totalorder %s20, 2
      %p101 = scmp.ne.s32.totalorder %s96, %s98
      %p102 = scmp.eq.s32.totalorder %s20, 0
      %p103 = por %p101, %p102
      %p104 = scmp.ne.s32.totalorder %s96, %s98
      %p105 = scmp.eq.s32.totalorder %s25, 2
      %p106 = por %p104, %p105
      %p107 = scmp.ne.s32.totalorder %s98, %s99
      %p108 = scmp.eq.s32.totalorder %s25, 0
      %p109 = por %p107, %p108
      %p110 = scmp.ne.s32.totalorder %s98, %s99
      %p111 = scmp.eq.s32.totalorder %s26, 2
      %p112 = por %p110, %p111
      %p114 = scmp.ne.s32.totalorder %s99, %s113
      %p115 = scmp.eq.s32.totalorder %s26, 0
      %p116 = por %p114, %p115
      %s117 = ssub.s32 %s20, %s27
      %p118 = scmp.eq.s32.totalorder %s117, 0
      %s120 = sadd.s32 %s119, 1
      %s121 = scalar_select %p118, %s119, %s120
      %p124 = pneg %p118
      %p125 = scmp.eq.s32.totalorder %s20, 2
      %p126 = por %p124, %p125
      %p127 = scmp.ne.s32.totalorder %s119, %s122
      %p128 = scmp.eq.s32.totalorder %s20, 0
      %p129 = por %p127, %p128
      %p130 = scmp.ne.s32.totalorder %s119, %s122
      %p131 = scmp.eq.s32.totalorder %s25, 2
      %p132 = por %p130, %p131
      %p133 = scmp.ne.s32.totalorder %s122, %s123
      %p134 = scmp.eq.s32.totalorder %s25, 0
      %p135 = por %p133, %p134
      %p136 = scmp.ne.s32.totalorder %s122, %s123
      %p137 = scmp.eq.s32.totalorder %s26, 2
      %p138 = por %p136, %p137
      %p140 = scmp.ne.s32.totalorder %s123, %s139
      %p141 = scmp.eq.s32.totalorder %s26, 0
      %p142 = por %p140, %p141
      %s144 = sadd.s32 %s143, 1
      %p147 = scmp.eq.s32.totalorder %s20, 2
      %p148 = scmp.ne.s32.totalorder %s143, %s145
      %p149 = scmp.eq.s32.totalorder %s20, 0
      %p150 = por %p148, %p149
      %p151 = scmp.ne.s32.totalorder %s143, %s145
      %p152 = scmp.eq.s32.totalorder %s25, 2
      %p153 = por %p151, %p152
      %p154 = scmp.ne.s32.totalorder %s145, %s146
      %p155 = scmp.eq.s32.totalorder %s25, 0
      %p156 = por %p154, %p155
      %p157 = scmp.ne.s32.totalorder %s145, %s146
      %p158 = scmp.eq.s32.totalorder %s26, 2
      %p159 = por %p157, %p158
      %p161 = scmp.ne.s32.totalorder %s146, %s160
      %p162 = scmp.eq.s32.totalorder %s26, 0
      %p163 = por %p161, %p162
      %p164 = scmp.le.s32.totalorder 1, %s20
      %p165 = scmp.lt.s32.totalorder %s20, 4
      %p166 = pnand %p164, %p165
      %p167 = pneg %p166
      // Predicated region
      $region9: #{tpu_custom_call.1} parent=5 // pred_check
        _
      $region10: #{tpu_custom_call.1} parent=5 // pred_check_branch
        %169 = sbr.rel (%p166) target = $region12
      $region11: #{tpu_custom_call.1} parent=5 // pred_region
        %s170 = ssub.s32 %s20, 1
        // Predicated region
        $region13: #{tpu_custom_call.1} parent=11 // pred_check
          %p171 = pneg %p67
        $region14: #{tpu_custom_call.1} parent=11 // pred_check_branch
          %173 = sbr.rel (%p171) target = $region16
        $region15: #{tpu_custom_call.1} parent=11 // pred_region
          %s175 = ssub.s32 128, 128
          %176 = vsyncadd [#allocation7], %s175
          %s178 = sshll.u32 [#allocation6], 4
          %s179 = int_to_ptr.vmem [resolvable:$true] %s178
          %181 = dma.hbm_to_vmem [thread:$0]  %s1, 128, %s179, [#allocation7]
        $region16: #{tpu_custom_call.1} parent=11 // pred_fallthru
          _
        // Predicated region
        $region17: #{tpu_custom_call.1} parent=11 // pred_check
          %p182 = pneg %p88
        $region18: #{tpu_custom_call.1} parent=11 // pred_check_branch
          %184 = sbr.rel (%p182) target = $region20
        $region19: #{tpu_custom_call.1} parent=11 // pred_region
          %s186 = ssub.s32 4096, 4096
          %187 = vsyncadd [#allocation7], %s186
          %s188 = sshll.u32 [#allocation8], 4
          %s189 = int_to_ptr.vmem [resolvable:$true] %s188
          %194 = dma.hbm_to_vmem [thread:$0]  %s2, 4096, %s189, [#allocation7], 128, 128, 8
        $region20: #{tpu_custom_call.1} parent=11 // pred_fallthru
          _
        // Predicated region
        $region21: #{tpu_custom_call.1} parent=11 // pred_check
          %p195 = pneg %p109
        $region22: #{tpu_custom_call.1} parent=11 // pred_check_branch
          %197 = sbr.rel (%p195) target = $region24
        $region23: #{tpu_custom_call.1} parent=11 // pred_region
          _
        $region24: #{tpu_custom_call.1} parent=11 // pred_fallthru
          _
      $region12: #{tpu_custom_call.1} parent=5 // pred_fallthru
        _
      %p198 = scmp.lt.s32.totalorder %s20, 3
      // Predicated region
      $region25: #{tpu_custom_call.1} parent=5 // pred_check
        %p199 = pneg %p198
      $region26: #{tpu_custom_call.1} parent=5 // pred_check_branch
        %201 = sbr.rel (%p199) target = $region28
      $region27: #{tpu_custom_call.1} parent=5 // pred_region
        // Predicated region
        $region29: #{tpu_custom_call.1} parent=27 // pred_check
          %p202 = pneg %p40
        $region30: #{tpu_custom_call.1} parent=27 // pred_check_branch
          %204 = sbr.rel (%p202) target = $region32
        $region31: #{tpu_custom_call.1} parent=27 // pred_region
          %s205 = sand.u32 %s30, 1
          %s206 = scalar_lea.sflag [#allocation4], %s205
          %s207 = sand.u32 %s30, 1
          %s208 = smul.addr %s207, 32
          %s209 = scalar_lea.vmem [#allocation3], %s208
          %s210 = smul.u32 4, %s20
          %s212 = ssub.s32 512, 512
          %213 = vsyncadd %s206, %s212
          %s214 = smul.addr %s210, 128
          %s215 = scalar_lea.hbm %s0, %s214
          %s216 = sshll.u32 %s209, 4
          %s217 = int_to_ptr.vmem [resolvable:$true] %s216
          %222 = dma.hbm_to_vmem [thread:$0]  %s215, 512, %s217, %s206, 128, 128, 8
        $region32: #{tpu_custom_call.1} parent=27 // pred_fallthru
          _
      $region28: #{tpu_custom_call.1} parent=5 // pred_fallthru
        _
      %p223 = scmp.le.s32.totalorder 1, %s20
      %p224 = scmp.lt.s32.totalorder %s20, 4
      %p225 = pnand %p223, %p224
      %p226 = pneg %p225
      // Predicated region
      $region33: #{tpu_custom_call.1} parent=5 // pred_check
        _
      $region34: #{tpu_custom_call.1} parent=5 // pred_check_branch
        %228 = sbr.rel (%p225) target = $region36
      $region35: #{tpu_custom_call.1} parent=5 // pred_region
        %s229 = ssub.s32 %s20, 1
        %s230 = sand.u32 %s33, 1
        %s231 = scalar_lea.sflag [#allocation4], %s230
        %s232 = sand.u32 %s33, 1
        %s233 = smul.addr %s232, 32
        %s234 = scalar_lea.vmem [#allocation3], %s233
        // Predicated region
        $region37: #{tpu_custom_call.1} parent=35 // pred_check
          %p235 = pneg %p46
        $region38: #{tpu_custom_call.1} parent=35 // pred_check_branch
          %237 = sbr.rel (%p235) target = $region40
        $region39: #{tpu_custom_call.1} parent=35 // pred_region
          %238 = dma.done %s231, 512
        $region40: #{tpu_custom_call.1} parent=35 // pred_fallthru
          _
        // Predicated region
        $region41: #{tpu_custom_call.1} parent=35 // pred_check
          %p239 = pneg %p67
        $region42: #{tpu_custom_call.1} parent=35 // pred_check_branch
          %241 = sbr.rel (%p239) target = $region44
        $region43: #{tpu_custom_call.1} parent=35 // pred_region
          %242 = dma.done [#allocation7], 128
        $region44: #{tpu_custom_call.1} parent=35 // pred_fallthru
          _
        // Predicated region
        $region45: #{tpu_custom_call.1} parent=35 // pred_check
          %p243 = pneg %p88
        $region46: #{tpu_custom_call.1} parent=35 // pred_check_branch
          %245 = sbr.rel (%p243) target = $region48
        $region47: #{tpu_custom_call.1} parent=35 // pred_region
          %246 = dma.done [#allocation7], 4096
        $region48: #{tpu_custom_call.1} parent=35 // pred_fallthru
          _
        %s247 = sand.u32 %s33, 1
        %s248 = scalar_lea.sflag [#allocation4], %s247
        %s249 = sand.u32 %s33, 1
        %s250 = smul.addr %s249, 32
        %s251 = scalar_lea.vmem [#allocation3], %s250
        %p252 = pneg %p46
        %p253 = pneg %p43
        %p254 = pneg %p67
        %p255 = pneg %p64
        %p256 = pneg %p88
        %p257 = pneg %p85
        %p258 = pneg %p109
        %p259 = pneg %p106
        %p260 = pneg %p135
        %p261 = pneg %p132
        %s262 = sand.u32 %s122, 1
        %s263 = scalar_lea.sflag [#allocation5], %s262
        %s264 = sand.u32 %s122, 1
        %s265 = smul.addr %s264, 32
        %s266 = scalar_lea.vmem [#allocation9], %s265
        %p267 = pneg %p156
        %p268 = pneg %p153
        %s269 = smul.u32 4, %s25
        %s270 = smul.u32 4, %s25
        %p271 = scmp.eq.s32.totalorder %s25, 0
        // Predicated region
        $region49: #{tpu_custom_call.1} parent=35 // pred_check
          %p272 = pneg %p271
        $region50: #{tpu_custom_call.1} parent=35 // pred_check_branch
          %274 = sbr.rel (%p272) target = $region52
        $region51: #{tpu_custom_call.1} parent=35 // pred_region
          %v275 = vld [vmem:[#allocation6] sm:$0xff]
          %276 = vst [vmem:[#allocation2 + $0x8] sm:$0xff] %v275
        $region52: #{tpu_custom_call.1} parent=35 // pred_fallthru
          _
        %v277 = vld [vmem:[#allocation8] sm:$0xff]
        %v278 = vld [vmem:[#allocation8 + $0x8] sm:$0xff]
        %v279 = vld [vmem:[#allocation8 + $0x10] sm:$0xff]
        %v280 = vld [vmem:[#allocation8 + $0x18] sm:$0xff]
        %v281 = vld [vmem:[#allocation8 + $0x20] sm:$0xff]
        %v282 = vld [vmem:[#allocation8 + $0x28] sm:$0xff]
        %v283 = vld [vmem:[#allocation8 + $0x30] sm:$0xff]
        %v284 = vld [vmem:[#allocation8 + $0x38] sm:$0xff]
        %v285 = vld [vmem:[#allocation8 + $0x40] sm:$0xff]
        %v286 = vld [vmem:[#allocation8 + $0x48] sm:$0xff]
        %v287 = vld [vmem:[#allocation8 + $0x50] sm:$0xff]
        %v288 = vld [vmem:[#allocation8 + $0x58] sm:$0xff]
        %v289 = vld [vmem:[#allocation8 + $0x60] sm:$0xff]
        %v290 = vld [vmem:[#allocation8 + $0x68] sm:$0xff]
        %v291 = vld [vmem:[#allocation8 + $0x70] sm:$0xff]
        %v292 = vld [vmem:[#allocation8 + $0x78] sm:$0xff]
        %v293 = vld [vmem:[#allocation8 + $0x80] sm:$0xff]
        %v294 = vld [vmem:[#allocation8 + $0x88] sm:$0xff]
        %v295 = vld [vmem:[#allocation8 + $0x90] sm:$0xff]
        %v296 = vld [vmem:[#allocation8 + $0x98] sm:$0xff]
        %v297 = vld [vmem:[#allocation8 + $0xa0] sm:$0xff]
        %v298 = vld [vmem:[#allocation8 + $0xa8] sm:$0xff]
        %v299 = vld [vmem:[#allocation8 + $0xb0] sm:$0xff]
        %v300 = vld [vmem:[#allocation8 + $0xb8] sm:$0xff]
        %v301 = vld [vmem:[#allocation8 + $0xc0] sm:$0xff]
        %v302 = vld [vmem:[#allocation8 + $0xc8] sm:$0xff]
        %v303 = vld [vmem:[#allocation8 + $0xd0] sm:$0xff]
        %v304 = vld [vmem:[#allocation8 + $0xd8] sm:$0xff]
        %v305 = vld [vmem:[#allocation8 + $0xe0] sm:$0xff]
        %v306 = vld [vmem:[#allocation8 + $0xe8] sm:$0xff]
        %v307 = vld [vmem:[#allocation8 + $0xf0] sm:$0xff]
        %v308 = vld [vmem:[#allocation8 + $0xf8] sm:$0xff]
        %v309 = vld [vmem:[%s3] sm:$0x1]
        %v310 = vld [vmem:[#allocation2 + $0x8] sm:$0xff]
        %311 = vst [vmem:[%s266] sm:$0xff] %v310
        %v312 = vld [vmem:[%s234] sm:$0xff]
        %313 = vst [vmem:[#allocation2] sm:$0xff] %v312
        %v314 = vld [vmem:[#allocation2] sm:$0xff]
        %v315 = vld [vmem:[#allocation2 + $0x8] sm:$0xff]
        %v317 = vlaneseq
        %v318 = vshrl.u32 %v317, 7
        %v319 = vsub.s32 0, %v318
        %v320 = vrot.slane %v309, %v319
        %322 = vmatprep.subr.mxu0 0.0
        %323 = vmatpush1.msra.mxu0 %v277
        %324 = vmatprep.subr.mxu0 0.0
        %325 = vmatpush1.msra.mxu0 %v278
        %326 = vmatprep.subr.mxu0 0.0
        %327 = vmatpush1.msra.mxu0 %v279
        %328 = vmatprep.subr.mxu0 0.0
        %329 = vmatpush1.msra.mxu0 %v280
        %330 = vmatprep.subr.mxu0 0.0
        %331 = vmatpush1.msra.mxu0 %v281
        %332 = vmatprep.subr.mxu0 0.0
        %333 = vmatpush1.msra.mxu0 %v282
        %334 = vmatprep.subr.mxu0 0.0
        %335 = vmatpush1.msra.mxu0 %v283
        %336 = vmatprep.subr.mxu0 0.0
        %337 = vmatpush1.msra.mxu0 %v284
        %338 = vmatprep.subr.mxu0 0.0
        %339 = vmatpush1.msra.mxu0 %v285
        %340 = vmatprep.subr.mxu0 0.0
        %341 = vmatpush1.msra.mxu0 %v286
        %342 = vmatprep.subr.mxu0 0.0
        %343 = vmatpush1.msra.mxu0 %v287
        %344 = vmatprep.subr.mxu0 0.0
        %345 = vmatpush1.msra.mxu0 %v288
        %346 = vmatprep.subr.mxu0 0.0
        %347 = vmatpush1.msra.mxu0 %v289
        %348 = vmatprep.subr.mxu0 0.0
        %349 = vmatpush1.msra.mxu0 %v290
        %350 = vmatprep.subr.mxu0 0.0
        %351 = vmatpush1.msra.mxu0 %v291
        %352 = vmatprep.subr.mxu0 0.0
        %353 = vmatpush1.msra.mxu0 %v292
        %354 = vmatprep.subr.mxu0 0.0
        %355 = vmatpush1.msra.mxu0 %v293
        %356 = vmatprep.subr.mxu0 0.0
        %357 = vmatpush1.msra.mxu0 %v294
        %358 = vmatprep.subr.mxu0 0.0
        %359 = vmatpush1.msra.mxu0 %v295
        %360 = vmatprep.subr.mxu0 0.0
        %361 = vmatpush1.msra.mxu0 %v296
        %362 = vmatprep.subr.mxu0 0.0
        %363 = vmatpush1.msra.mxu0 %v297
        %364 = vmatprep.subr.mxu0 0.0
        %365 = vmatpush1.msra.mxu0 %v298
        %366 = vmatprep.subr.mxu0 0.0
        %367 = vmatpush1.msra.mxu0 %v299
        %368 = vmatprep.subr.mxu0 0.0
        %369 = vmatpush1.msra.mxu0 %v300
        %370 = vmatprep.subr.mxu0 0.0
        %371 = vmatpush1.msra.mxu0 %v301
        %372 = vmatprep.subr.mxu0 0.0
        %373 = vmatpush1.msra.mxu0 %v302
        %374 = vmatprep.subr.mxu0 0.0
        %375 = vmatpush1.msra.mxu0 %v303
        %376 = vmatprep.subr.mxu0 0.0
        %377 = vmatpush1.msra.mxu0 %v304
        %378 = vmatprep.subr.mxu0 0.0
        %379 = vmatpush1.msra.mxu0 %v305
        %380 = vmatprep.subr.mxu0 0.0
        %381 = vmatpush1.msra.mxu0 %v306
        %382 = vmatprep.subr.mxu0 0.0
        %383 = vmatpush1.msra.mxu0 %v307
        %384 = vmatprep.subr.mxu0 0.0
        %385 = vmatpush1.msra.mxu0 %v308
        %386 = vmatprep.mubr.f32.mxu0 %v315
        %387 = vmatmul.mubr.f32.gmra.mrb[0].mxu0 %v314
        %v388 = vpop.f32.mrb[0].mxu0
        %v389 = vadd.f32 %v320, %v388
        %v390 = vpop.f32.mrb[0].mxu0
        %391 = vdwg.mxu0
        %s392 = smul.u32 %s25, 4
        %p393 = scmp.lt.s32.totalorder %s392, 10
        %s394 = scalar_select %p393, 1, 0
        %v395 = vstv %s394
        %vm396 = vcmp.eq.s32.totalorder %v395, 1
        %v397 = vsel %vm396, %v389, %v310
        %398 = vst [vmem:[#allocation2 + $0x8] sm:$0xff] %v397
        %v399 = vld [vmem:[#allocation2 + $0x8] sm:$0xff]
        %s400 = scalar_lea.vmem %s266, 8 [#allocation9]
        %401 = vst [vmem:[%s400] sm:$0xff] %v399
        %s402 = scalar_lea.vmem %s234, 8 [#allocation3]
        %v403 = vld [vmem:[%s402] sm:$0xff]
        %404 = vst [vmem:[#allocation2] sm:$0xff] %v403
        %v405 = vld [vmem:[#allocation2] sm:$0xff]
        %v406 = vld [vmem:[#allocation2 + $0x8] sm:$0xff]
        %407 = vmatprep.subr.mxu0 0.0
        %408 = vmatpush1.msra.mxu0 %v277
        %409 = vmatprep.subr.mxu0 0.0
        %410 = vmatpush1.msra.mxu0 %v278
        %411 = vmatprep.subr.mxu0 0.0
        %412 = vmatpush1.msra.mxu0 %v279
        %413 = vmatprep.subr.mxu0 0.0
        %414 = vmatpush1.msra.mxu0 %v280
        %415 = vmatprep.subr.mxu0 0.0
        %416 = vmatpush1.msra.mxu0 %v281
        %417 = vmatprep.subr.mxu0 0.0
        %418 = vmatpush1.msra.mxu0 %v282
        %419 = vmatprep.subr.mxu0 0.0
        %420 = vmatpush1.msra.mxu0 %v283
        %421 = vmatprep.subr.mxu0 0.0
        %422 = vmatpush1.msra.mxu0 %v284
        %423 = vmatprep.subr.mxu0 0.0
        %424 = vmatpush1.msra.mxu0 %v285
        %425 = vmatprep.subr.mxu0 0.0
        %426 = vmatpush1.msra.mxu0 %v286
        %427 = vmatprep.subr.mxu0 0.0
        %428 = vmatpush1.msra.mxu0 %v287
        %429 = vmatprep.subr.mxu0 0.0
        %430 = vmatpush1.msra.mxu0 %v288
        %431 = vmatprep.subr.mxu0 0.0
        %432 = vmatpush1.msra.mxu0 %v289
        %433 = vmatprep.subr.mxu0 0.0
        %434 = vmatpush1.msra.mxu0 %v290
        %435 = vmatprep.subr.mxu0 0.0
        %436 = vmatpush1.msra.mxu0 %v291
        %437 = vmatprep.subr.mxu0 0.0
        %438 = vmatpush1.msra.mxu0 %v292
        %439 = vmatprep.subr.mxu0 0.0
        %440 = vmatpush1.msra.mxu0 %v293
        %441 = vmatprep.subr.mxu0 0.0
        %442 = vmatpush1.msra.mxu0 %v294
        %443 = vmatprep.subr.mxu0 0.0
        %444 = vmatpush1.msra.mxu0 %v295
        %445 = vmatprep.subr.mxu0 0.0
        %446 = vmatpush1.msra.mxu0 %v296
        %447 = vmatprep.subr.mxu0 0.0
        %448 = vmatpush1.msra.mxu0 %v297
        %449 = vmatprep.subr.mxu0 0.0
        %450 = vmatpush1.msra.mxu0 %v298
        %451 = vmatprep.subr.mxu0 0.0
        %452 = vmatpush1.msra.mxu0 %v299
        %453 = vmatprep.subr.mxu0 0.0
        %454 = vmatpush1.msra.mxu0 %v300
        %455 = vmatprep.subr.mxu0 0.0
        %456 = vmatpush1.msra.mxu0 %v301
        %457 = vmatprep.subr.mxu0 0.0
        %458 = vmatpush1.msra.mxu0 %v302
        %459 = vmatprep.subr.mxu0 0.0
        %460 = vmatpush1.msra.mxu0 %v303
        %461 = vmatprep.subr.mxu0 0.0
        %462 = vmatpush1.msra.mxu0 %v304
        %463 = vmatprep.subr.mxu0 0.0
        %464 = vmatpush1.msra.mxu0 %v305
        %465 = vmatprep.subr.mxu0 0.0
        %466 = vmatpush1.msra.mxu0 %v306
        %467 = vmatprep.subr.mxu0 0.0
        %468 = vmatpush1.msra.mxu0 %v307
        %469 = vmatprep.subr.mxu0 0.0
        %470 = vmatpush1.msra.mxu0 %v308
        %471 = vmatprep.mubr.f32.mxu0 %v406
        %472 = vmatmul.mubr.f32.gmra.mrb[0].mxu0 %v405
        %v473 = vpop.f32.mrb[0].mxu0
        %v474 = vadd.f32 %v320, %v473
        %v475 = vpop.f32.mrb[0].mxu0
        %476 = vdwg.mxu0
        %s477 = sadd.s32 %s392, 1
        %p478 = scmp.lt.s32.totalorder %s477, 10
        %s479 = scalar_select %p478, 1, 0
        %v480 = vstv %s479
        %vm481 = vcmp.eq.s32.totalorder %v480, 1
        %v482 = vsel %vm481, %v474, %v399
        %483 = vst [vmem:[#allocation2 + $0x8] sm:$0xff] %v482
        %v484 = vld [vmem:[#allocation2 + $0x8] sm:$0xff]
        %s485 = scalar_lea.vmem %s266, 16 [#allocation9]
        %486 = vst [vmem:[%s485] sm:$0xff] %v484
        %s487 = scalar_lea.vmem %s234, 16 [#allocation3]
        %v488 = vld [vmem:[%s487] sm:$0xff]
        %489 = vst [vmem:[#allocation2] sm:$0xff] %v488
        %v490 = vld [vmem:[#allocation2] sm:$0xff]
        %v491 = vld [vmem:[#allocation2 + $0x8] sm:$0xff]
        %492 = vmatprep.subr.mxu0 0.0
        %493 = vmatpush1.msra.mxu0 %v277
        %494 = vmatprep.subr.mxu0 0.0
        %495 = vmatpush1.msra.mxu0 %v278
        %496 = vmatprep.subr.mxu0 0.0
        %497 = vmatpush1.msra.mxu0 %v279
        %498 = vmatprep.subr.mxu0 0.0
        %499 = vmatpush1.msra.mxu0 %v280
        %500 = vmatprep.subr.mxu0 0.0
        %501 = vmatpush1.msra.mxu0 %v281
        %502 = vmatprep.subr.mxu0 0.0
        %503 = vmatpush1.msra.mxu0 %v282
        %504 = vmatprep.subr.mxu0 0.0
        %505 = vmatpush1.msra.mxu0 %v283
        %506 = vmatprep.subr.mxu0 0.0
        %507 = vmatpush1.msra.mxu0 %v284
        %508 = vmatprep.subr.mxu0 0.0
        %509 = vmatpush1.msra.mxu0 %v285
        %510 = vmatprep.subr.mxu0 0.0
        %511 = vmatpush1.msra.mxu0 %v286
        %512 = vmatprep.subr.mxu0 0.0
        %513 = vmatpush1.msra.mxu0 %v287
        %514 = vmatprep.subr.mxu0 0.0
        %515 = vmatpush1.msra.mxu0 %v288
        %516 = vmatprep.subr.mxu0 0.0
        %517 = vmatpush1.msra.mxu0 %v289
        %518 = vmatprep.subr.mxu0 0.0
        %519 = vmatpush1.msra.mxu0 %v290
        %520 = vmatprep.subr.mxu0 0.0
        %521 = vmatpush1.msra.mxu0 %v291
        %522 = vmatprep.subr.mxu0 0.0
        %523 = vmatpush1.msra.mxu0 %v292
        %524 = vmatprep.subr.mxu0 0.0
        %525 = vmatpush1.msra.mxu0 %v293
        %526 = vmatprep.subr.mxu0 0.0
        %527 = vmatpush1.msra.mxu0 %v294
        %528 = vmatprep.subr.mxu0 0.0
        %529 = vmatpush1.msra.mxu0 %v295
        %530 = vmatprep.subr.mxu0 0.0
        %531 = vmatpush1.msra.mxu0 %v296
        %532 = vmatprep.subr.mxu0 0.0
        %533 = vmatpush1.msra.mxu0 %v297
        %534 = vmatprep.subr.mxu0 0.0
        %535 = vmatpush1.msra.mxu0 %v298
        %536 = vmatprep.subr.mxu0 0.0
        %537 = vmatpush1.msra.mxu0 %v299
        %538 = vmatprep.subr.mxu0 0.0
        %539 = vmatpush1.msra.mxu0 %v300
        %540 = vmatprep.subr.mxu0 0.0
        %541 = vmatpush1.msra.mxu0 %v301
        %542 = vmatprep.subr.mxu0 0.0
        %543 = vmatpush1.msra.mxu0 %v302
        %544 = vmatprep.subr.mxu0 0.0
        %545 = vmatpush1.msra.mxu0 %v303
        %546 = vmatprep.subr.mxu0 0.0
        %547 = vmatpush1.msra.mxu0 %v304
        %548 = vmatprep.subr.mxu0 0.0
        %549 = vmatpush1.msra.mxu0 %v305
        %550 = vmatprep.subr.mxu0 0.0
        %551 = vmatpush1.msra.mxu0 %v306
        %552 = vmatprep.subr.mxu0 0.0
        %553 = vmatpush1.msra.mxu0 %v307
        %554 = vmatprep.subr.mxu0 0.0
        %555 = vmatpush1.msra.mxu0 %v308
        %556 = vmatprep.mubr.f32.mxu0 %v491
        %557 = vmatmul.mubr.f32.gmra.mrb[0].mxu0 %v490
        %v558 = vpop.f32.mrb[0].mxu0
        %v559 = vadd.f32 %v320, %v558
        %v560 = vpop.f32.mrb[0].mxu0
        %561 = vdwg.mxu0
        %s562 = sadd.s32 %s392, 2
        %p563 = scmp.lt.s32.totalorder %s562, 10
        %s564 = scalar_select %p563, 1, 0
        %v565 = vstv %s564
        %vm566 = vcmp.eq.s32.totalorder %v565, 1
        %v567 = vsel %vm566, %v559, %v484
        %568 = vst [vmem:[#allocation2 + $0x8] sm:$0xff] %v567
        %v569 = vld [vmem:[#allocation2 + $0x8] sm:$0xff]
        %s570 = scalar_lea.vmem %s266, 24 [#allocation9]
        %571 = vst [vmem:[%s570] sm:$0xff] %v569
        %s572 = scalar_lea.vmem %s234, 24 [#allocation3]
        %v573 = vld [vmem:[%s572] sm:$0xff]
        %574 = vst [vmem:[#allocation2] sm:$0xff] %v573
        %v575 = vld [vmem:[#allocation2] sm:$0xff]
        %v576 = vld [vmem:[#allocation2 + $0x8] sm:$0xff]
        %577 = vmatprep.subr.mxu0 0.0
        %578 = vmatpush1.msra.mxu0 %v277
        %579 = vmatprep.subr.mxu0 0.0
        %580 = vmatpush1.msra.mxu0 %v278
        %581 = vmatprep.subr.mxu0 0.0
        %582 = vmatpush1.msra.mxu0 %v279
        %583 = vmatprep.subr.mxu0 0.0
        %584 = vmatpush1.msra.mxu0 %v280
        %585 = vmatprep.subr.mxu0 0.0
        %586 = vmatpush1.msra.mxu0 %v281
        %587 = vmatprep.subr.mxu0 0.0
        %588 = vmatpush1.msra.mxu0 %v282
        %589 = vmatprep.subr.mxu0 0.0
        %590 = vmatpush1.msra.mxu0 %v283
        %591 = vmatprep.subr.mxu0 0.0
        %592 = vmatpush1.msra.mxu0 %v284
        %593 = vmatprep.subr.mxu0 0.0
        %594 = vmatpush1.msra.mxu0 %v285
        %595 = vmatprep.subr.mxu0 0.0
        %596 = vmatpush1.msra.mxu0 %v286
        %597 = vmatprep.subr.mxu0 0.0
        %598 = vmatpush1.msra.mxu0 %v287
        %599 = vmatprep.subr.mxu0 0.0
        %600 = vmatpush1.msra.mxu0 %v288
        %601 = vmatprep.subr.mxu0 0.0
        %602 = vmatpush1.msra.mxu0 %v289
        %603 = vmatprep.subr.mxu0 0.0
        %604 = vmatpush1.msra.mxu0 %v290
        %605 = vmatprep.subr.mxu0 0.0
        %606 = vmatpush1.msra.mxu0 %v291
        %607 = vmatprep.subr.mxu0 0.0
        %608 = vmatpush1.msra.mxu0 %v292
        %609 = vmatprep.subr.mxu0 0.0
        %610 = vmatpush1.msra.mxu0 %v293
        %611 = vmatprep.subr.mxu0 0.0
        %612 = vmatpush1.msra.mxu0 %v294
        %613 = vmatprep.subr.mxu0 0.0
        %614 = vmatpush1.msra.mxu0 %v295
        %615 = vmatprep.subr.mxu0 0.0
        %616 = vmatpush1.msra.mxu0 %v296
        %617 = vmatprep.subr.mxu0 0.0
        %618 = vmatpush1.msra.mxu0 %v297
        %619 = vmatprep.subr.mxu0 0.0
        %620 = vmatpush1.msra.mxu0 %v298
        %621 = vmatprep.subr.mxu0 0.0
        %622 = vmatpush1.msra.mxu0 %v299
        %623 = vmatprep.subr.mxu0 0.0
        %624 = vmatpush1.msra.mxu0 %v300
        %625 = vmatprep.subr.mxu0 0.0
        %626 = vmatpush1.msra.mxu0 %v301
        %627 = vmatprep.subr.mxu0 0.0
        %628 = vmatpush1.msra.mxu0 %v302
        %629 = vmatprep.subr.mxu0 0.0
        %630 = vmatpush1.msra.mxu0 %v303
        %631 = vmatprep.subr.mxu0 0.0
        %632 = vmatpush1.msra.mxu0 %v304
        %633 = vmatprep.subr.mxu0 0.0
        %634 = vmatpush1.msra.mxu0 %v305
        %635 = vmatprep.subr.mxu0 0.0
        %636 = vmatpush1.msra.mxu0 %v306
        %637 = vmatprep.subr.mxu0 0.0
        %638 = vmatpush1.msra.mxu0 %v307
        %639 = vmatprep.subr.mxu0 0.0
        %640 = vmatpush1.msra.mxu0 %v308
        %641 = vmatprep.mubr.f32.mxu0 %v576
        %642 = vmatmul.mubr.f32.gmra.mrb[0].mxu0 %v575
        %v643 = vpop.f32.mrb[0].mxu0
        %v644 = vadd.f32 %v320, %v643
        %v645 = vpop.f32.mrb[0].mxu0
        %646 = vdwg.mxu0
        %s647 = sadd.s32 %s392, 3
        %p648 = scmp.lt.s32.totalorder %s647, 10
        %s649 = scalar_select %p648, 1, 0
        %v650 = vstv %s649
        %vm651 = vcmp.eq.s32.totalorder %v650, 1
        %v652 = vsel %vm651, %v644, %v569
        %653 = vst [vmem:[#allocation2 + $0x8] sm:$0xff] %v652
        %p654 = scmp.eq.s32.totalorder %s25, 2
        // Predicated region
        $region53: #{tpu_custom_call.1} parent=35 // pred_check
          %p655 = pneg %p654
        $region54: #{tpu_custom_call.1} parent=35 // pred_check_branch
          %657 = sbr.rel (%p655) target = $region56
        $region55: #{tpu_custom_call.1} parent=35 // pred_region
          %v658 = vld [vmem:[#allocation2 + $0x8] sm:$0xff]
          %659 = vst [vmem:[#allocation10] sm:$0xff] %v658
        $region56: #{tpu_custom_call.1} parent=35 // pred_fallthru
          _
        %s660 = sand.u32 %s122, 1
        %s661 = scalar_lea.sflag [#allocation5], %s660
        %s662 = sand.u32 %s122, 1
        %s663 = smul.addr %s662, 32
        %s664 = scalar_lea.vmem [#allocation9], %s663
        // Predicated region
        $region57: #{tpu_custom_call.1} parent=35 // pred_check
          %p665 = pneg %p132
        $region58: #{tpu_custom_call.1} parent=35 // pred_check_branch
          %667 = sbr.rel (%p665) target = $region60
        $region59: #{tpu_custom_call.1} parent=35 // pred_region
          %s668 = smul.u32 4, %s25
          %s670 = ssub.s32 512, 512
          %671 = vsyncadd %s661, %s670
          %s672 = smul.addr %s668, 128
          %s673 = scalar_lea.hbm %s4, %s672
          %s674 = sshll.u32 %s664, 4
          %s675 = int_to_ptr.vmem [resolvable:$true] %s674
          %680 = dma.vmem_to_hbm [thread:$0]  %s675, 512, %s673, %s661, 128, 128, 8
        $region60: #{tpu_custom_call.1} parent=35 // pred_fallthru
          _
        // Predicated region
        $region61: #{tpu_custom_call.1} parent=35 // pred_check
          %p681 = pneg %p153
        $region62: #{tpu_custom_call.1} parent=35 // pred_check_branch
          %683 = sbr.rel (%p681) target = $region64
        $region63: #{tpu_custom_call.1} parent=35 // pred_region
          %s685 = ssub.s32 128, 128
          %686 = vsyncadd [#allocation11], %s685
          %s688 = sshll.u32 [#allocation10], 4
          %s689 = int_to_ptr.vmem [resolvable:$true] %s688
          %691 = dma.vmem_to_hbm [thread:$0]  %s689, 128, %s5, [#allocation11]
        $region64: #{tpu_custom_call.1} parent=35 // pred_fallthru
          _
        // Predicated region
        $region65: #{tpu_custom_call.1} parent=35 // pred_check
          %p692 = pneg %p153
        $region66: #{tpu_custom_call.1} parent=35 // pred_check_branch
          %694 = sbr.rel (%p692) target = $region68
        $region67: #{tpu_custom_call.1} parent=35 // pred_region
          %695 = dma.done [#allocation11], 128
        $region68: #{tpu_custom_call.1} parent=35 // pred_fallthru
          _
      $region36: #{tpu_custom_call.1} parent=5 // pred_fallthru
        _
      %p696 = scmp.le.s32.totalorder 2, %s20
      // Predicated region
      $region69: #{tpu_custom_call.1} parent=5 // pred_check
        %p697 = pneg %p696
      $region70: #{tpu_custom_call.1} parent=5 // pred_check_branch
        %699 = sbr.rel (%p697) target = $region72
      $region71: #{tpu_custom_call.1} parent=5 // pred_region
        %s700 = ssub.s32 %s20, 2
        // Predicated region
        $region73: #{tpu_custom_call.1} parent=71 // pred_check
          %p701 = pneg %p138
        $region74: #{tpu_custom_call.1} parent=71 // pred_check_branch
          %703 = sbr.rel (%p701) target = $region76
        $region75: #{tpu_custom_call.1} parent=71 // pred_region
          %s704 = sand.u32 %s123, 1
          %s705 = scalar_lea.sflag [#allocation5], %s704
          %s706 = sand.u32 %s123, 1
          %s707 = smul.addr %s706, 32
          %s708 = scalar_lea.vmem [#allocation9], %s707
          %709 = dma.done %s705, 512
        $region76: #{tpu_custom_call.1} parent=71 // pred_fallthru
          _
      $region72: #{tpu_custom_call.1} parent=5 // pred_fallthru
        _
    $region6: #{tpu_custom_call.1} parent=1 // loop_footer
      %s24 = sadd.s32 1, %s20
    $region7: #{tpu_custom_call.1} parent=1 // loop_footer_branch
      %19 = sbr.rel target = $region3
    $region8: #{tpu_custom_call.1} parent=1 // loop_exit
      _
    %710 = vsyncpa [#allocation4], 1
    %s711 = scalar_lea.sflag [#allocation4], 1
    %712 = vsyncpa %s711, 1
    %713 = vsyncpa [#allocation7], 1
    %714 = vsyncpa [#allocation5], 1
    %s715 = scalar_lea.sflag [#allocation5], 1
    %716 = vsyncpa %s715, 1
    %717 = vsyncpa [#allocation11], 1

</llo_original>
